<compile_context>
chip_gen: v5e
topology: v5e:2x2
jax: 0.10.0
libtpu: 0.0.40
codegen_flags: <defaults>
</compile_context>

<pallas_src>
import jax
import jax.numpy as jnp
from jax.experimental import pallas as pl
from jax.experimental.pallas import tpu as pltpu

B = 2          # batch
T = 8          # n_channels  -> LSTM sequence length after squeeze(2)
IN = 16        # seq_length  -> LSTM input_size (features per step)
H = 64         # hidden_dim
NOUT = 2       # n_classes

BP = 8         # batch padded to one full sublane tile
HP = 128       # per-gate width padded to one full lane tile (vreg-aligned slices)
G = 4 * H      # stacked gates (i, f, g, o), PyTorch order
GP = 4 * HP    # padded stacked gates


def lstm_kernel(x_ref, wih_ref, whh_ref, bg_ref, wfc_ref, bfc_ref, o_ref):
    # Input projection for ALL timesteps and (padded) batch rows: one MXU push.
    # x_ref is time-major, sublane-tile aligned: step t occupies rows [t*BP, (t+1)*BP).
    xp = jnp.dot(x_ref[...], wih_ref[...],
                 preferred_element_type=jnp.float32) + bg_ref[...]     # (T*BP, GP) f32

    whh = whh_ref[...]                                                 # (HP, GP) bf16
    h = jnp.zeros((BP, HP), jnp.float32)
    c = jnp.zeros((BP, HP), jnp.float32)

    # T=8 fully unrolled; h/c live in vregs across steps (no VMEM round-trip).
    for t in range(T):
        xp_t = xp[t * BP:(t + 1) * BP, :]                              # aligned sublane tile
        gates = xp_t + jnp.dot(h.astype(jnp.bfloat16), whh,
                               preferred_element_type=jnp.float32)     # (BP, GP) f32
        # i/f/o pre-activations were pre-scaled by 0.5 in the weights, so a single
        # EUP tanh over all 512 lanes yields every gate nonlinearity:
        #   sigmoid(z) = 0.5 * tanh(z/2) + 0.5   (i, f, o),   tanh(z)  (g)
        tg = jnp.tanh(gates)
        i_g = 0.5 * tg[:, 0 * HP:1 * HP] + 0.5
        f_g = 0.5 * tg[:, 1 * HP:2 * HP] + 0.5
        g_g = tg[:, 2 * HP:3 * HP]
        o_g = 0.5 * tg[:, 3 * HP:4 * HP] + 0.5
        c = f_g * c + i_g * g_g
        h = o_g * jnp.tanh(c)

    # fc on the stacked (padded) batch, then exact softmax over classes in f32.
    logits = jnp.dot(h.astype(jnp.bfloat16), wfc_ref[...],
                     preferred_element_type=jnp.float32) + bfc_ref[...]  # (BP, NOUT)
    m = jnp.max(logits, axis=1, keepdims=True)
    e = jnp.exp(logits - m)
    probs = e / jnp.sum(e, axis=1, keepdims=True)
    o_ref[...] = probs[:B, :]


def prepare_params(params):
    """One-time weight-side prep (off the per-call hot path):
    transpose for right-multiplication, pad each gate block to 128 lanes, fuse
    b_ih + b_hh, fold the sigmoid 1/2 scale into i/f/o columns, cast MXU
    operands to bf16 (biases stay f32)."""
    w_ih, w_hh, b_ih, b_hh, w_fc, b_fc = params

    gate_scale = jnp.concatenate([jnp.full((H,), 0.5), jnp.full((H,), 0.5),
                                  jnp.ones((H,)), jnp.full((H,), 0.5)]
                                 ).astype(jnp.float32)                    # (G,)

    def pad_gate_cols(a):  # (..., 4H) -> (..., GP), each gate 128-lane aligned, zero-padded
        blocks = [a[..., g * H:(g + 1) * H] for g in range(4)]
        pads = [(0, 0)] * (a.ndim - 1) + [(0, HP - H)]
        return jnp.concatenate([jnp.pad(blk, pads) for blk in blocks], axis=-1)

    wih_p = pad_gate_cols(jnp.transpose(w_ih) * gate_scale).astype(jnp.bfloat16)    # (IN, GP)
    whh_p = pad_gate_cols(jnp.transpose(w_hh) * gate_scale)                          # (H, GP)
    whh_p = jnp.pad(whh_p, ((0, HP - H), (0, 0))).astype(jnp.bfloat16)               # (HP, GP)
    bg_p = pad_gate_cols((b_ih + b_hh) * gate_scale).reshape(1, GP).astype(jnp.float32)
    wfc_p = jnp.pad(jnp.transpose(w_fc), ((0, HP - H), (0, 0))).astype(jnp.bfloat16)  # (HP, NOUT)
    bfc_p = b_fc.reshape(1, NOUT).astype(jnp.float32)
    return (wih_p, whh_p, bg_p, wfc_p, bfc_p)


@jax.jit
def lstm_forward(x, prep):
    """x: (B, T, 1, IN) float32 (PyTorch layout); prep: prepare_params(params).
    Entire forward (x prep + pallas_call) runs under a single jit dispatch."""
    wih_p, whh_p, bg_p, wfc_p, bfc_p = prep
    xs = jnp.squeeze(x, axis=2)                              # (B, T, IN)
    x_t = jnp.transpose(xs, (1, 0, 2))                       # (T, B, IN) time-major
    x_pad = jnp.pad(x_t, ((0, 0), (0, BP - B), (0, 0)))      # (T, BP, IN)
    x_tb = x_pad.reshape(T * BP, IN).astype(jnp.bfloat16)    # step t at rows [t*BP, (t+1)*BP)

    vmem = pl.BlockSpec(memory_space=pltpu.MemorySpace.VMEM)
    return pl.pallas_call(
        lstm_kernel,
        out_shape=jax.ShapeDtypeStruct((B, NOUT), jnp.float32),
        in_specs=[vmem] * 6,
        out_specs=vmem,
    )(x_tb, wih_p, whh_p, bg_p, wfc_p, bfc_p)


def init_params(key):
    """Deterministic synthetic params with PyTorch-default-like uniform init."""
    ks = jax.random.split(key, 6)

    def u(k, shape, bound):
        return jax.random.uniform(k, shape, jnp.float32, -bound, bound)

    lstm_bound = 1.0 / jnp.sqrt(float(H))
    fc_bound = 1.0 / jnp.sqrt(float(H))
    w_ih = u(ks[0], (G, IN), lstm_bound)
    w_hh = u(ks[1], (G, H), lstm_bound)
    b_ih = u(ks[2], (G,), lstm_bound)
    b_hh = u(ks[3], (G,), lstm_bound)
    w_fc = u(ks[4], (NOUT, H), fc_bound)
    b_fc = u(ks[5], (NOUT,), fc_bound)
    return (w_ih, w_hh, b_ih, b_hh, w_fc, b_fc)


def reference_forward(x, params):
    """Plain-JAX f32 reference mirroring the PyTorch forward (gate order i,f,g,o)."""
    w_ih, w_hh, b_ih, b_hh, w_fc, b_fc = params
    xs = jnp.squeeze(x, axis=2)                              # (B, T, IN)

    def step(carry, x_t):
        h, c = carry
        gates = x_t @ w_ih.T + b_ih + h @ w_hh.T + b_hh      # (B, 4H)
        i = jax.nn.sigmoid(gates[:, 0 * H:1 * H])
        f = jax.nn.sigmoid(gates[:, 1 * H:2 * H])
        g = jnp.tanh(gates[:, 2 * H:3 * H])
        o = jax.nn.sigmoid(gates[:, 3 * H:4 * H])
        c = f * c + i * g
        h = o * jnp.tanh(c)
        return (h, c), None

    h0 = jnp.zeros((B, H), jnp.float32)
    c0 = jnp.zeros((B, H), jnp.float32)
    (h_last, _), _ = jax.lax.scan(step, (h0, c0), jnp.transpose(xs, (1, 0, 2)))
    logits = h_last @ w_fc.T + b_fc
    return jax.nn.softmax(logits, axis=1)


if __name__ == "__main__":
    key = jax.random.PRNGKey(0)
    pkey, xkey = jax.random.split(key)
    params = init_params(pkey)
    prep = prepare_params(params)                            # one-time weight prep
    x = jax.random.normal(xkey, (B, T, 1, IN), jnp.float32)  # (2, 8, 1, 16)

    y = lstm_forward(x, prep)
    y = jax.block_until_ready(y)

    y_ref = reference_forward(x, params)
    assert y.shape == (B, NOUT)
    # bf16 MXU operands (f32 accumulation) + EUP tanh approximation vs an all-f32
    # reference: ~1e-3 abs error expected on the softmax probabilities.
    assert jnp.allclose(y, y_ref, atol=1e-2, rtol=1e-2), (y, y_ref)
    print("KERNEL_OK")
</pallas_src>

<mosaic_0001>
module attributes {stable_mosaic.version = 11 : i64} {
  func.func @lstm_kernel(%arg0: memref<64x16xbf16, #tpu.memory_space<vmem>>, %arg1: memref<16x512xbf16, #tpu.memory_space<vmem>>, %arg2: memref<128x512xbf16, #tpu.memory_space<vmem>>, %arg3: memref<1x512xf32, #tpu.memory_space<vmem>>, %arg4: memref<128x2xbf16, #tpu.memory_space<vmem>>, %arg5: memref<1x2xf32, #tpu.memory_space<vmem>>, %arg6: memref<2x2xf32, #tpu.memory_space<vmem>>) attributes {dimension_semantics = [], scalar_prefetch = 0 : i64, scratch_operands = 0 : i64, tpu.core_type = #tpu.core_type<tc>} {
    %c0 = arith.constant 0 : index
    %c0_0 = arith.constant 0 : index
    %0 = vector.load %arg0[%c0, %c0_0] : memref<64x16xbf16, #tpu.memory_space<vmem>>, vector<64x16xbf16>
    %c0_1 = arith.constant 0 : index
    %c0_2 = arith.constant 0 : index
    %1 = vector.load %arg1[%c0_1, %c0_2] : memref<16x512xbf16, #tpu.memory_space<vmem>>, vector<16x512xbf16>
    %cst = arith.constant dense<0.000000e+00> : vector<64x512xf32>
    %2 = tpu.matmul %0, %1, %cst {dimension_numbers = #tpu.dot_dimension_numbers<[1], [0], [0], [1], [0, 0, 1, 1], [], []>} : vector<64x16xbf16>, vector<16x512xbf16>, vector<64x512xf32> -> vector<64x512xf32>
    %c0_3 = arith.constant 0 : index
    %c0_4 = arith.constant 0 : index
    %3 = vector.load %arg3[%c0_3, %c0_4] : memref<1x512xf32, #tpu.memory_space<vmem>>, vector<1x512xf32>
    %4 = vector.broadcast %3 : vector<1x512xf32> to vector<64x512xf32>
    %5 = arith.addf %2, %4 : vector<64x512xf32>
    %c0_5 = arith.constant 0 : index
    %c0_6 = arith.constant 0 : index
    %6 = vector.load %arg2[%c0_5, %c0_6] : memref<128x512xbf16, #tpu.memory_space<vmem>>, vector<128x512xbf16>
    %cst_7 = arith.constant 0.000000e+00 : f32
    %7 = vector.broadcast %cst_7 : f32 to vector<8x128xf32>
    %cst_8 = arith.constant 0.000000e+00 : f32
    %8 = vector.broadcast %cst_8 : f32 to vector<8x128xf32>
    %9 = vector.extract_strided_slice %5 {offsets = [0, 0], sizes = [8, 512], strides = [1, 1]} : vector<64x512xf32> to vector<8x512xf32>
    %10 = arith.truncf %7 : vector<8x128xf32> to vector<8x128xbf16>
    %cst_9 = arith.constant dense<0.000000e+00> : vector<8x512xf32>
    %11 = tpu.matmul %10, %6, %cst_9 {dimension_numbers = #tpu.dot_dimension_numbers<[1], [0], [0], [1], [0, 0, 1, 1], [], []>} : vector<8x128xbf16>, vector<128x512xbf16>, vector<8x512xf32> -> vector<8x512xf32>
    %12 = arith.addf %9, %11 : vector<8x512xf32>
    %13 = math.tanh %12 : vector<8x512xf32>
    %14 = vector.extract_strided_slice %13 {offsets = [0, 0], sizes = [8, 128], strides = [1, 1]} : vector<8x512xf32> to vector<8x128xf32>
    %cst_10 = arith.constant 5.000000e-01 : f32
    %15 = vector.broadcast %cst_10 : f32 to vector<8x128xf32>
    %16 = arith.mulf %15, %14 : vector<8x128xf32>
    %cst_11 = arith.constant 5.000000e-01 : f32
    %17 = vector.broadcast %cst_11 : f32 to vector<8x128xf32>
    %18 = arith.addf %16, %17 : vector<8x128xf32>
    %19 = vector.extract_strided_slice %13 {offsets = [0, 128], sizes = [8, 128], strides = [1, 1]} : vector<8x512xf32> to vector<8x128xf32>
    %cst_12 = arith.constant 5.000000e-01 : f32
    %20 = vector.broadcast %cst_12 : f32 to vector<8x128xf32>
    %21 = arith.mulf %20, %19 : vector<8x128xf32>
    %cst_13 = arith.constant 5.000000e-01 : f32
    %22 = vector.broadcast %cst_13 : f32 to vector<8x128xf32>
    %23 = arith.addf %21, %22 : vector<8x128xf32>
    %24 = vector.extract_strided_slice %13 {offsets = [0, 256], sizes = [8, 128], strides = [1, 1]} : vector<8x512xf32> to vector<8x128xf32>
    %25 = vector.extract_strided_slice %13 {offsets = [0, 384], sizes = [8, 128], strides = [1, 1]} : vector<8x512xf32> to vector<8x128xf32>
    %cst_14 = arith.constant 5.000000e-01 : f32
    %26 = vector.broadcast %cst_14 : f32 to vector<8x128xf32>
    %27 = arith.mulf %26, %25 : vector<8x128xf32>
    %cst_15 = arith.constant 5.000000e-01 : f32
    %28 = vector.broadcast %cst_15 : f32 to vector<8x128xf32>
    %29 = arith.addf %27, %28 : vector<8x128xf32>
    %30 = arith.mulf %23, %8 : vector<8x128xf32>
    %31 = arith.mulf %18, %24 : vector<8x128xf32>
    %32 = arith.addf %30, %31 : vector<8x128xf32>
    %33 = math.tanh %32 : vector<8x128xf32>
    %34 = arith.mulf %29, %33 : vector<8x128xf32>
    %35 = vector.extract_strided_slice %5 {offsets = [8, 0], sizes = [8, 512], strides = [1, 1]} : vector<64x512xf32> to vector<8x512xf32>
    %36 = arith.truncf %34 : vector<8x128xf32> to vector<8x128xbf16>
    %cst_16 = arith.constant dense<0.000000e+00> : vector<8x512xf32>
    %37 = tpu.matmul %36, %6, %cst_16 {dimension_numbers = #tpu.dot_dimension_numbers<[1], [0], [0], [1], [0, 0, 1, 1], [], []>} : vector<8x128xbf16>, vector<128x512xbf16>, vector<8x512xf32> -> vector<8x512xf32>
    %38 = arith.addf %35, %37 : vector<8x512xf32>
    %39 = math.tanh %38 : vector<8x512xf32>
    %40 = vector.extract_strided_slice %39 {offsets = [0, 0], sizes = [8, 128], strides = [1, 1]} : vector<8x512xf32> to vector<8x128xf32>
    %cst_17 = arith.constant 5.000000e-01 : f32
    %41 = vector.broadcast %cst_17 : f32 to vector<8x128xf32>
    %42 = arith.mulf %41, %40 : vector<8x128xf32>
    %cst_18 = arith.constant 5.000000e-01 : f32
    %43 = vector.broadcast %cst_18 : f32 to vector<8x128xf32>
    %44 = arith.addf %42, %43 : vector<8x128xf32>
    %45 = vector.extract_strided_slice %39 {offsets = [0, 128], sizes = [8, 128], strides = [1, 1]} : vector<8x512xf32> to vector<8x128xf32>
    %cst_19 = arith.constant 5.000000e-01 : f32
    %46 = vector.broadcast %cst_19 : f32 to vector<8x128xf32>
    %47 = arith.mulf %46, %45 : vector<8x128xf32>
    %cst_20 = arith.constant 5.000000e-01 : f32
    %48 = vector.broadcast %cst_20 : f32 to vector<8x128xf32>
    %49 = arith.addf %47, %48 : vector<8x128xf32>
    %50 = vector.extract_strided_slice %39 {offsets = [0, 256], sizes = [8, 128], strides = [1, 1]} : vector<8x512xf32> to vector<8x128xf32>
    %51 = vector.extract_strided_slice %39 {offsets = [0, 384], sizes = [8, 128], strides = [1, 1]} : vector<8x512xf32> to vector<8x128xf32>
    %cst_21 = arith.constant 5.000000e-01 : f32
    %52 = vector.broadcast %cst_21 : f32 to vector<8x128xf32>
    %53 = arith.mulf %52, %51 : vector<8x128xf32>
    %cst_22 = arith.constant 5.000000e-01 : f32
    %54 = vector.broadcast %cst_22 : f32 to vector<8x128xf32>
    %55 = arith.addf %53, %54 : vector<8x128xf32>
    %56 = arith.mulf %49, %32 : vector<8x128xf32>
    %57 = arith.mulf %44, %50 : vector<8x128xf32>
    %58 = arith.addf %56, %57 : vector<8x128xf32>
    %59 = math.tanh %58 : vector<8x128xf32>
    %60 = arith.mulf %55, %59 : vector<8x128xf32>
    %61 = vector.extract_strided_slice %5 {offsets = [16, 0], sizes = [8, 512], strides = [1, 1]} : vector<64x512xf32> to vector<8x512xf32>
    %62 = arith.truncf %60 : vector<8x128xf32> to vector<8x128xbf16>
    %cst_23 = arith.constant dense<0.000000e+00> : vector<8x512xf32>
    %63 = tpu.matmul %62, %6, %cst_23 {dimension_numbers = #tpu.dot_dimension_numbers<[1], [0], [0], [1], [0, 0, 1, 1], [], []>} : vector<8x128xbf16>, vector<128x512xbf16>, vector<8x512xf32> -> vector<8x512xf32>
    %64 = arith.addf %61, %63 : vector<8x512xf32>
    %65 = math.tanh %64 : vector<8x512xf32>
    %66 = vector.extract_strided_slice %65 {offsets = [0, 0], sizes = [8, 128], strides = [1, 1]} : vector<8x512xf32> to vector<8x128xf32>
    %cst_24 = arith.constant 5.000000e-01 : f32
    %67 = vector.broadcast %cst_24 : f32 to vector<8x128xf32>
    %68 = arith.mulf %67, %66 : vector<8x128xf32>
    %cst_25 = arith.constant 5.000000e-01 : f32
    %69 = vector.broadcast %cst_25 : f32 to vector<8x128xf32>
    %70 = arith.addf %68, %69 : vector<8x128xf32>
    %71 = vector.extract_strided_slice %65 {offsets = [0, 128], sizes = [8, 128], strides = [1, 1]} : vector<8x512xf32> to vector<8x128xf32>
    %cst_26 = arith.constant 5.000000e-01 : f32
    %72 = vector.broadcast %cst_26 : f32 to vector<8x128xf32>
    %73 = arith.mulf %72, %71 : vector<8x128xf32>
    %cst_27 = arith.constant 5.000000e-01 : f32
    %74 = vector.broadcast %cst_27 : f32 to vector<8x128xf32>
    %75 = arith.addf %73, %74 : vector<8x128xf32>
    %76 = vector.extract_strided_slice %65 {offsets = [0, 256], sizes = [8, 128], strides = [1, 1]} : vector<8x512xf32> to vector<8x128xf32>
    %77 = vector.extract_strided_slice %65 {offsets = [0, 384], sizes = [8, 128], strides = [1, 1]} : vector<8x512xf32> to vector<8x128xf32>
    %cst_28 = arith.constant 5.000000e-01 : f32
    %78 = vector.broadcast %cst_28 : f32 to vector<8x128xf32>
    %79 = arith.mulf %78, %77 : vector<8x128xf32>
    %cst_29 = arith.constant 5.000000e-01 : f32
    %80 = vector.broadcast %cst_29 : f32 to vector<8x128xf32>
    %81 = arith.addf %79, %80 : vector<8x128xf32>
    %82 = arith.mulf %75, %58 : vector<8x128xf32>
    %83 = arith.mulf %70, %76 : vector<8x128xf32>
    %84 = arith.addf %82, %83 : vector<8x128xf32>
    %85 = math.tanh %84 : vector<8x128xf32>
    %86 = arith.mulf %81, %85 : vector<8x128xf32>
    %87 = vector.extract_strided_slice %5 {offsets = [24, 0], sizes = [8, 512], strides = [1, 1]} : vector<64x512xf32> to vector<8x512xf32>
    %88 = arith.truncf %86 : vector<8x128xf32> to vector<8x128xbf16>
    %cst_30 = arith.constant dense<0.000000e+00> : vector<8x512xf32>
    %89 = tpu.matmul %88, %6, %cst_30 {dimension_numbers = #tpu.dot_dimension_numbers<[1], [0], [0], [1], [0, 0, 1, 1], [], []>} : vector<8x128xbf16>, vector<128x512xbf16>, vector<8x512xf32> -> vector<8x512xf32>
    %90 = arith.addf %87, %89 : vector<8x512xf32>
    %91 = math.tanh %90 : vector<8x512xf32>
    %92 = vector.extract_strided_slice %91 {offsets = [0, 0], sizes = [8, 128], strides = [1, 1]} : vector<8x512xf32> to vector<8x128xf32>
    %cst_31 = arith.constant 5.000000e-01 : f32
    %93 = vector.broadcast %cst_31 : f32 to vector<8x128xf32>
    %94 = arith.mulf %93, %92 : vector<8x128xf32>
    %cst_32 = arith.constant 5.000000e-01 : f32
    %95 = vector.broadcast %cst_32 : f32 to vector<8x128xf32>
    %96 = arith.addf %94, %95 : vector<8x128xf32>
    %97 = vector.extract_strided_slice %91 {offsets = [0, 128], sizes = [8, 128], strides = [1, 1]} : vector<8x512xf32> to vector<8x128xf32>
    %cst_33 = arith.constant 5.000000e-01 : f32
    %98 = vector.broadcast %cst_33 : f32 to vector<8x128xf32>
    %99 = arith.mulf %98, %97 : vector<8x128xf32>
    %cst_34 = arith.constant 5.000000e-01 : f32
    %100 = vector.broadcast %cst_34 : f32 to vector<8x128xf32>
    %101 = arith.addf %99, %100 : vector<8x128xf32>
    %102 = vector.extract_strided_slice %91 {offsets = [0, 256], sizes = [8, 128], strides = [1, 1]} : vector<8x512xf32> to vector<8x128xf32>
    %103 = vector.extract_strided_slice %91 {offsets = [0, 384], sizes = [8, 128], strides = [1, 1]} : vector<8x512xf32> to vector<8x128xf32>
    %cst_35 = arith.constant 5.000000e-01 : f32
    %104 = vector.broadcast %cst_35 : f32 to vector<8x128xf32>
    %105 = arith.mulf %104, %103 : vector<8x128xf32>
    %cst_36 = arith.constant 5.000000e-01 : f32
    %106 = vector.broadcast %cst_36 : f32 to vector<8x128xf32>
    %107 = arith.addf %105, %106 : vector<8x128xf32>
    %108 = arith.mulf %101, %84 : vector<8x128xf32>
    %109 = arith.mulf %96, %102 : vector<8x128xf32>
    %110 = arith.addf %108, %109 : vector<8x128xf32>
    %111 = math.tanh %110 : vector<8x128xf32>
    %112 = arith.mulf %107, %111 : vector<8x128xf32>
    %113 = vector.extract_strided_slice %5 {offsets = [32, 0], sizes = [8, 512], strides = [1, 1]} : vector<64x512xf32> to vector<8x512xf32>
    %114 = arith.truncf %112 : vector<8x128xf32> to vector<8x128xbf16>
    %cst_37 = arith.constant dense<0.000000e+00> : vector<8x512xf32>
    %115 = tpu.matmul %114, %6, %cst_37 {dimension_numbers = #tpu.dot_dimension_numbers<[1], [0], [0], [1], [0, 0, 1, 1], [], []>} : vector<8x128xbf16>, vector<128x512xbf16>, vector<8x512xf32> -> vector<8x512xf32>
    %116 = arith.addf %113, %115 : vector<8x512xf32>
    %117 = math.tanh %116 : vector<8x512xf32>
    %118 = vector.extract_strided_slice %117 {offsets = [0, 0], sizes = [8, 128], strides = [1, 1]} : vector<8x512xf32> to vector<8x128xf32>
    %cst_38 = arith.constant 5.000000e-01 : f32
    %119 = vector.broadcast %cst_38 : f32 to vector<8x128xf32>
    %120 = arith.mulf %119, %118 : vector<8x128xf32>
    %cst_39 = arith.constant 5.000000e-01 : f32
    %121 = vector.broadcast %cst_39 : f32 to vector<8x128xf32>
    %122 = arith.addf %120, %121 : vector<8x128xf32>
    %123 = vector.extract_strided_slice %117 {offsets = [0, 128], sizes = [8, 128], strides = [1, 1]} : vector<8x512xf32> to vector<8x128xf32>
    %cst_40 = arith.constant 5.000000e-01 : f32
    %124 = vector.broadcast %cst_40 : f32 to vector<8x128xf32>
    %125 = arith.mulf %124, %123 : vector<8x128xf32>
    %cst_41 = arith.constant 5.000000e-01 : f32
    %126 = vector.broadcast %cst_41 : f32 to vector<8x128xf32>
    %127 = arith.addf %125, %126 : vector<8x128xf32>
    %128 = vector.extract_strided_slice %117 {offsets = [0, 256], sizes = [8, 128], strides = [1, 1]} : vector<8x512xf32> to vector<8x128xf32>
    %129 = vector.extract_strided_slice %117 {offsets = [0, 384], sizes = [8, 128], strides = [1, 1]} : vector<8x512xf32> to vector<8x128xf32>
    %cst_42 = arith.constant 5.000000e-01 : f32
    %130 = vector.broadcast %cst_42 : f32 to vector<8x128xf32>
    %131 = arith.mulf %130, %129 : vector<8x128xf32>
    %cst_43 = arith.constant 5.000000e-01 : f32
    %132 = vector.broadcast %cst_43 : f32 to vector<8x128xf32>
    %133 = arith.addf %131, %132 : vector<8x128xf32>
    %134 = arith.mulf %127, %110 : vector<8x128xf32>
    %135 = arith.mulf %122, %128 : vector<8x128xf32>
    %136 = arith.addf %134, %135 : vector<8x128xf32>
    %137 = math.tanh %136 : vector<8x128xf32>
    %138 = arith.mulf %133, %137 : vector<8x128xf32>
    %139 = vector.extract_strided_slice %5 {offsets = [40, 0], sizes = [8, 512], strides = [1, 1]} : vector<64x512xf32> to vector<8x512xf32>
    %140 = arith.truncf %138 : vector<8x128xf32> to vector<8x128xbf16>
    %cst_44 = arith.constant dense<0.000000e+00> : vector<8x512xf32>
    %141 = tpu.matmul %140, %6, %cst_44 {dimension_numbers = #tpu.dot_dimension_numbers<[1], [0], [0], [1], [0, 0, 1, 1], [], []>} : vector<8x128xbf16>, vector<128x512xbf16>, vector<8x512xf32> -> vector<8x512xf32>
    %142 = arith.addf %139, %141 : vector<8x512xf32>
    %143 = math.tanh %142 : vector<8x512xf32>
    %144 = vector.extract_strided_slice %143 {offsets = [0, 0], sizes = [8, 128], strides = [1, 1]} : vector<8x512xf32> to vector<8x128xf32>
    %cst_45 = arith.constant 5.000000e-01 : f32
    %145 = vector.broadcast %cst_45 : f32 to vector<8x128xf32>
    %146 = arith.mulf %145, %144 : vector<8x128xf32>
    %cst_46 = arith.constant 5.000000e-01 : f32
    %147 = vector.broadcast %cst_46 : f32 to vector<8x128xf32>
    %148 = arith.addf %146, %147 : vector<8x128xf32>
    %149 = vector.extract_strided_slice %143 {offsets = [0, 128], sizes = [8, 128], strides = [1, 1]} : vector<8x512xf32> to vector<8x128xf32>
    %cst_47 = arith.constant 5.000000e-01 : f32
    %150 = vector.broadcast %cst_47 : f32 to vector<8x128xf32>
    %151 = arith.mulf %150, %149 : vector<8x128xf32>
    %cst_48 = arith.constant 5.000000e-01 : f32
    %152 = vector.broadcast %cst_48 : f32 to vector<8x128xf32>
    %153 = arith.addf %151, %152 : vector<8x128xf32>
    %154 = vector.extract_strided_slice %143 {offsets = [0, 256], sizes = [8, 128], strides = [1, 1]} : vector<8x512xf32> to vector<8x128xf32>
    %155 = vector.extract_strided_slice %143 {offsets = [0, 384], sizes = [8, 128], strides = [1, 1]} : vector<8x512xf32> to vector<8x128xf32>
    %cst_49 = arith.constant 5.000000e-01 : f32
    %156 = vector.broadcast %cst_49 : f32 to vector<8x128xf32>
    %157 = arith.mulf %156, %155 : vector<8x128xf32>
    %cst_50 = arith.constant 5.000000e-01 : f32
    %158 = vector.broadcast %cst_50 : f32 to vector<8x128xf32>
    %159 = arith.addf %157, %158 : vector<8x128xf32>
    %160 = arith.mulf %153, %136 : vector<8x128xf32>
    %161 = arith.mulf %148, %154 : vector<8x128xf32>
    %162 = arith.addf %160, %161 : vector<8x128xf32>
    %163 = math.tanh %162 : vector<8x128xf32>
    %164 = arith.mulf %159, %163 : vector<8x128xf32>
    %165 = vector.extract_strided_slice %5 {offsets = [48, 0], sizes = [8, 512], strides = [1, 1]} : vector<64x512xf32> to vector<8x512xf32>
    %166 = arith.truncf %164 : vector<8x128xf32> to vector<8x128xbf16>
    %cst_51 = arith.constant dense<0.000000e+00> : vector<8x512xf32>
    %167 = tpu.matmul %166, %6, %cst_51 {dimension_numbers = #tpu.dot_dimension_numbers<[1], [0], [0], [1], [0, 0, 1, 1], [], []>} : vector<8x128xbf16>, vector<128x512xbf16>, vector<8x512xf32> -> vector<8x512xf32>
    %168 = arith.addf %165, %167 : vector<8x512xf32>
    %169 = math.tanh %168 : vector<8x512xf32>
    %170 = vector.extract_strided_slice %169 {offsets = [0, 0], sizes = [8, 128], strides = [1, 1]} : vector<8x512xf32> to vector<8x128xf32>
    %cst_52 = arith.constant 5.000000e-01 : f32
    %171 = vector.broadcast %cst_52 : f32 to vector<8x128xf32>
    %172 = arith.mulf %171, %170 : vector<8x128xf32>
    %cst_53 = arith.constant 5.000000e-01 : f32
    %173 = vector.broadcast %cst_53 : f32 to vector<8x128xf32>
    %174 = arith.addf %172, %173 : vector<8x128xf32>
    %175 = vector.extract_strided_slice %169 {offsets = [0, 128], sizes = [8, 128], strides = [1, 1]} : vector<8x512xf32> to vector<8x128xf32>
    %cst_54 = arith.constant 5.000000e-01 : f32
    %176 = vector.broadcast %cst_54 : f32 to vector<8x128xf32>
    %177 = arith.mulf %176, %175 : vector<8x128xf32>
    %cst_55 = arith.constant 5.000000e-01 : f32
    %178 = vector.broadcast %cst_55 : f32 to vector<8x128xf32>
    %179 = arith.addf %177, %178 : vector<8x128xf32>
    %180 = vector.extract_strided_slice %169 {offsets = [0, 256], sizes = [8, 128], strides = [1, 1]} : vector<8x512xf32> to vector<8x128xf32>
    %181 = vector.extract_strided_slice %169 {offsets = [0, 384], sizes = [8, 128], strides = [1, 1]} : vector<8x512xf32> to vector<8x128xf32>
    %cst_56 = arith.constant 5.000000e-01 : f32
    %182 = vector.broadcast %cst_56 : f32 to vector<8x128xf32>
    %183 = arith.mulf %182, %181 : vector<8x128xf32>
    %cst_57 = arith.constant 5.000000e-01 : f32
    %184 = vector.broadcast %cst_57 : f32 to vector<8x128xf32>
    %185 = arith.addf %183, %184 : vector<8x128xf32>
    %186 = arith.mulf %179, %162 : vector<8x128xf32>
    %187 = arith.mulf %174, %180 : vector<8x128xf32>
    %188 = arith.addf %186, %187 : vector<8x128xf32>
    %189 = math.tanh %188 : vector<8x128xf32>
    %190 = arith.mulf %185, %189 : vector<8x128xf32>
    %191 = vector.extract_strided_slice %5 {offsets = [56, 0], sizes = [8, 512], strides = [1, 1]} : vector<64x512xf32> to vector<8x512xf32>
    %192 = arith.truncf %190 : vector<8x128xf32> to vector<8x128xbf16>
    %cst_58 = arith.constant dense<0.000000e+00> : vector<8x512xf32>
    %193 = tpu.matmul %192, %6, %cst_58 {dimension_numbers = #tpu.dot_dimension_numbers<[1], [0], [0], [1], [0, 0, 1, 1], [], []>} : vector<8x128xbf16>, vector<128x512xbf16>, vector<8x512xf32> -> vector<8x512xf32>
    %194 = arith.addf %191, %193 : vector<8x512xf32>
    %195 = math.tanh %194 : vector<8x512xf32>
    %196 = vector.extract_strided_slice %195 {offsets = [0, 0], sizes = [8, 128], strides = [1, 1]} : vector<8x512xf32> to vector<8x128xf32>
    %cst_59 = arith.constant 5.000000e-01 : f32
    %197 = vector.broadcast %cst_59 : f32 to vector<8x128xf32>
    %198 = arith.mulf %197, %196 : vector<8x128xf32>
    %cst_60 = arith.constant 5.000000e-01 : f32
    %199 = vector.broadcast %cst_60 : f32 to vector<8x128xf32>
    %200 = arith.addf %198, %199 : vector<8x128xf32>
    %201 = vector.extract_strided_slice %195 {offsets = [0, 128], sizes = [8, 128], strides = [1, 1]} : vector<8x512xf32> to vector<8x128xf32>
    %cst_61 = arith.constant 5.000000e-01 : f32
    %202 = vector.broadcast %cst_61 : f32 to vector<8x128xf32>
    %203 = arith.mulf %202, %201 : vector<8x128xf32>
    %cst_62 = arith.constant 5.000000e-01 : f32
    %204 = vector.broadcast %cst_62 : f32 to vector<8x128xf32>
    %205 = arith.addf %203, %204 : vector<8x128xf32>
    %206 = vector.extract_strided_slice %195 {offsets = [0, 256], sizes = [8, 128], strides = [1, 1]} : vector<8x512xf32> to vector<8x128xf32>
    %207 = vector.extract_strided_slice %195 {offsets = [0, 384], sizes = [8, 128], strides = [1, 1]} : vector<8x512xf32> to vector<8x128xf32>
    %cst_63 = arith.constant 5.000000e-01 : f32
    %208 = vector.broadcast %cst_63 : f32 to vector<8x128xf32>
    %209 = arith.mulf %208, %207 : vector<8x128xf32>
    %cst_64 = arith.constant 5.000000e-01 : f32
    %210 = vector.broadcast %cst_64 : f32 to vector<8x128xf32>
    %211 = arith.addf %209, %210 : vector<8x128xf32>
    %212 = arith.mulf %205, %188 : vector<8x128xf32>
    %213 = arith.mulf %200, %206 : vector<8x128xf32>
    %214 = arith.addf %212, %213 : vector<8x128xf32>
    %215 = math.tanh %214 : vector<8x128xf32>
    %216 = arith.mulf %211, %215 : vector<8x128xf32>
    %217 = arith.truncf %216 : vector<8x128xf32> to vector<8x128xbf16>
    %c0_65 = arith.constant 0 : index
    %c0_66 = arith.constant 0 : index
    %218 = vector.load %arg4[%c0_65, %c0_66] : memref<128x2xbf16, #tpu.memory_space<vmem>>, vector<128x2xbf16>
    %cst_67 = arith.constant dense<0.000000e+00> : vector<8x2xf32>
    %219 = tpu.matmul %217, %218, %cst_67 {dimension_numbers = #tpu.dot_dimension_numbers<[1], [0], [0], [1], [0, 0, 1, 1], [], []>} : vector<8x128xbf16>, vector<128x2xbf16>, vector<8x2xf32> -> vector<8x2xf32>
    %c0_68 = arith.constant 0 : index
    %c0_69 = arith.constant 0 : index
    %220 = vector.load %arg5[%c0_68, %c0_69] : memref<1x2xf32, #tpu.memory_space<vmem>>, vector<1x2xf32>
    %221 = vector.broadcast %220 : vector<1x2xf32> to vector<8x2xf32>
    %222 = arith.addf %219, %221 : vector<8x2xf32>
    %cst_70 = arith.constant dense<0xFF800000> : vector<8xf32>
    %223 = vector.multi_reduction <maximumf>, %222, %cst_70 [1] : vector<8x2xf32> to vector<8xf32>
    %224 = vector.shape_cast %223 : vector<8xf32> to vector<8x1xf32>
    %225 = vector.broadcast %224 : vector<8x1xf32> to vector<8x2xf32>
    %226 = arith.subf %222, %225 : vector<8x2xf32>
    %227 = math.exp %226 : vector<8x2xf32>
    %cst_71 = arith.constant dense<0.000000e+00> : vector<8xf32>
    %228 = vector.multi_reduction <add>, %227, %cst_71 [1] : vector<8x2xf32> to vector<8xf32>
    %229 = vector.shape_cast %228 : vector<8xf32> to vector<8x1xf32>
    %230 = vector.broadcast %229 : vector<8x1xf32> to vector<8x2xf32>
    %231 = arith.divf %227, %230 : vector<8x2xf32>
    %232 = vector.extract_strided_slice %231 {offsets = [0, 0], sizes = [2, 2], strides = [1, 1]} : vector<8x2xf32> to vector<2x2xf32>
    %c0_72 = arith.constant 0 : index
    %c0_73 = arith.constant 0 : index
    %233 = vector.load %arg6[%c0_72, %c0_73] : memref<2x2xf32, #tpu.memory_space<vmem>>, vector<2x2xf32>
    tpu.vector_store %arg6[%c0_72, %c0_73], %232 {strides = array<i32>} : memref<2x2xf32, #tpu.memory_space<vmem>>, vector<2x2xf32>,
    return
  }
}

</mosaic_0001>

<llo_original>
// kernel: lstm_forward.1
$region0: #{lstm_forward.1}
  #allocation0 [shape = 'u32[]', space=smem, size = 0x4, offset = 0x4, fixed_abs, tag = 'smem constant byte address 0x4 - core index']
  #allocation1 [shape = 'u32[72,128]{1,0:T(1,128)}', space=vmem, size = 0x9000, scoped, tag = 'internal scratch']
  %s0 = inlined_call_operand.vmem [shape: bf16[64,16], index: 0, kind: input, shape index: {}]
  %s1 = inlined_call_operand.vmem [shape: bf16[16,512], index: 1, kind: input, shape index: {}]
  %s2 = inlined_call_operand.hbm [shape: bf16[128,512], index: 2, kind: input, shape index: {}]
  %s3 = inlined_call_operand.vmem [shape: f32[1,512], index: 3, kind: input, shape index: {}]
  %s4 = inlined_call_operand.vmem [shape: bf16[128,2], index: 4, kind: input, shape index: {}]
  %s5 = inlined_call_operand.vmem [shape: f32[1,2], index: 5, kind: input, shape index: {}]
  %s6 = inlined_call_operand.hbm [shape: f32[2,2], index: 6, kind: output, shape index: {}]
  %s7 = sld [smem:[#allocation0]]
  $region38: #{lstm_forward.1} parent=0
    _
  %s9 = ssub.s32 1, %s7
  %s10 = scalar_select 0, %s9, %s7
  $region1: #{lstm_forward.1} parent=0
    #allocation2 [shape = 'u8[131072]{0}', space=vmem, size = 0x20000, scoped, tag = 'input window, operand 2, single buffered']
    #allocation3 [shape = 's32[1]{0}', space=sflag, size = 0x4, scoped, tag = 'scoped memory for lstm_forward.1']
    #allocation4 [shape = 's32[1]{0}', space=sflag, size = 0x4, scoped, tag = 'scoped memory for lstm_forward.1']
    #allocation5 [shape = 'u8[1024]{0}', space=vmem, size = 0x400, scoped, tag = 'output window, operand 0, single buffered']
    %11 = vsyncpa [#allocation3], 0
    %12 = vsyncpa [#allocation4], 0
    // Predicated region
    $region2: #{lstm_forward.1} parent=1 // pred_check
      _
    $region3: #{lstm_forward.1} parent=1 // pred_check_branch
      %14 = sbr.rel (0) target = $region5
    $region4: #{lstm_forward.1} parent=1 // pred_region
      _
    $region5: #{lstm_forward.1} parent=1 // pred_fallthru
      _
    // Predicated region
    $region6: #{lstm_forward.1} parent=1 // pred_check
      _
    $region7: #{lstm_forward.1} parent=1 // pred_check_branch
      %16 = sbr.rel (0) target = $region9
    $region8: #{lstm_forward.1} parent=1 // pred_region
      _
    $region9: #{lstm_forward.1} parent=1 // pred_fallthru
      _
    // Predicated region
    $region10: #{lstm_forward.1} parent=1 // pred_check
      _
    $region11: #{lstm_forward.1} parent=1 // pred_check_branch
      %18 = sbr.rel (0) target = $region13
    $region12: #{lstm_forward.1} parent=1 // pred_region
      %20 = vsyncadd [#allocation3], 0
      %s21 = sshll.u32 %s2, 4
      %s22 = int_to_ptr.hbm [resolvable:$true] %s21
      %s23 = sshll.u32 [#allocation2], 4
      %s24 = int_to_ptr.vmem [resolvable:$true] %s23
      %29 = dma.hbm_to_vmem [thread:$0]  %s22, 4096, %s24, [#allocation3], 256, 256, 16
    $region13: #{lstm_forward.1} parent=1 // pred_fallthru
      _
    // Predicated region
    $region14: #{lstm_forward.1} parent=1 // pred_check
      _
    $region15: #{lstm_forward.1} parent=1 // pred_check_branch
      %31 = sbr.rel (0) target = $region17
    $region16: #{lstm_forward.1} parent=1 // pred_region
      _
    $region17: #{lstm_forward.1} parent=1 // pred_fallthru
      _
    // Predicated region
    $region18: #{lstm_forward.1} parent=1 // pred_check
      _
    $region19: #{lstm_forward.1} parent=1 // pred_check_branch
      %33 = sbr.rel (0) target = $region21
    $region20: #{lstm_forward.1} parent=1 // pred_region
      _
    $region21: #{lstm_forward.1} parent=1 // pred_fallthru
      _
    // Predicated region
    $region22: #{lstm_forward.1} parent=1 // pred_check
      _
    $region23: #{lstm_forward.1} parent=1 // pred_check_branch
      %35 = sbr.rel (0) target = $region25
    $region24: #{lstm_forward.1} parent=1 // pred_region
      _
    $region25: #{lstm_forward.1} parent=1 // pred_fallthru
      _
    // Predicated region
    $region26: #{lstm_forward.1} parent=1 // pred_check
      _
    $region27: #{lstm_forward.1} parent=1 // pred_check_branch
      %37 = sbr.rel (0) target = $region29
    $region28: #{lstm_forward.1} parent=1 // pred_region
      %39 = dma.done [#allocation3], 4096
    $region29: #{lstm_forward.1} parent=1 // pred_fallthru
      _
    %v41 = vld [vmem:[%s0] sm:$0xf]
    %v42 = vld [vmem:[%s0 + $0x4] sm:$0xf]
    %v43 = vld [vmem:[%s0 + $0x8] sm:$0xf]
    %v44 = vld [vmem:[%s0 + $0xc] sm:$0xf]
    %v45 = vld [vmem:[%s0 + $0x10] sm:$0xf]
    %v46 = vld [vmem:[%s0 + $0x14] sm:$0xf]
    %v47 = vld [vmem:[%s0 + $0x18] sm:$0xf]
    %v48 = vld [vmem:[%s0 + $0x1c] sm:$0xf]
    %v49 = vld [vmem:[%s1] sm:$0xff]
    %v50 = vld [vmem:[%s1 + $0x8] sm:$0xff]
    %v51 = vld [vmem:[%s1 + $0x10] sm:$0xff]
    %v52 = vld [vmem:[%s1 + $0x18] sm:$0xff]
    %v53 = vld [vmem:[%s3] sm:$0xf]
    %v55 = vperm.slane %v53, 0
    %v56 = vperm.slane %v53, 1
    %v57 = vperm.slane %v53, 2
    %v58 = vperm.slane %v53, 3
    %v71 = vunpack.c.l.b16 %v41
    %v72 = vunpack.c.l.b16 %v42
    %v73 = vunpack.c.l.b16 %v43
    %v74 = vunpack.c.l.b16 %v44
    %v75 = vunpack.c.l.b16 %v45
    %v76 = vunpack.c.l.b16 %v46
    %v77 = vunpack.c.l.b16 %v47
    %v78 = vunpack.c.l.b16 %v48
    %v79 = vpack.c.b16 %v72, %v71
    %v80 = vpack.c.b16 %v74, %v73
    %v81 = vpack.c.b16 %v76, %v75
    %v82 = vpack.c.b16 %v78, %v77
    %v87 = vunpack.c.l.b16 %v49
    %v88 = vunpack.c.h.b16 %v49
    %v89 = vunpack.c.l.b16 %v50
    %v90 = vunpack.c.h.b16 %v50
    %v91 = vunpack.c.l.b16 %v51
    %v92 = vunpack.c.h.b16 %v51
    %v93 = vunpack.c.l.b16 %v52
    %v94 = vunpack.c.h.b16 %v52
    %v95 = vpack.c.b16 %v91, %v87
    %v96 = vpack.c.b16 %v92, %v88
    %v97 = vpack.c.b16 %v93, %v89
    %v98 = vpack.c.b16 %v94, %v90
    %vm103 = vcmask 130048
    %v105 = vsel %vm103, %v79, 0
    %v108 = vsel %vm103, %v80, 0
    %v111 = vsel %vm103, %v81, 0
    %v114 = vsel %vm103, %v82, 0
    %116 = vmatpush.bf16.msra.mxu0 0
    %117 = vmatpush.bf16.msra.mxu0 0
    %118 = vmatpush.bf16.msra.mxu0 0
    %119 = vmatpush.bf16.msra.mxu0 0
    %120 = vmatpush.bf16.msra.mxu0 0
    %121 = vmatpush.bf16.msra.mxu0 0
    %122 = vmatpush.bf16.msra.mxu0 0
    %123 = vmatpush.bf16.msra.mxu0 %v95
    %124 = vmatmul.bf16.gmra.mxu0 %v105
    %v125 = vpop.f32.mrf.mxu0
    %v126 = vadd.f32 %v55, %v125
    %v127 = vpop.f32.mrf.mxu0
    %v128 = vadd.f32 %v55, %v127
    %129 = vmatmul.bf16.gmra.mxu0 %v108
    %v130 = vpop.f32.mrf.mxu0
    %v131 = vadd.f32 %v55, %v130
    %v132 = vpop.f32.mrf.mxu0
    %v133 = vadd.f32 %v55, %v132
    %134 = vmatmul.bf16.gmra.mxu0 %v111
    %v135 = vpop.f32.mrf.mxu0
    %v136 = vadd.f32 %v55, %v135
    %v137 = vpop.f32.mrf.mxu0
    %v138 = vadd.f32 %v55, %v137
    %139 = vmatmul.bf16.gmra.mxu0 %v114
    %v140 = vpop.f32.mrf.mxu0
    %v141 = vadd.f32 %v55, %v140
    %v142 = vpop.f32.mrf.mxu0
    %v143 = vadd.f32 %v55, %v142
    %144 = vdwg.mxu0
    %145 = vmatpush.bf16.msra.mxu0 0
    %146 = vmatpush.bf16.msra.mxu0 0
    %147 = vmatpush.bf16.msra.mxu0 0
    %148 = vmatpush.bf16.msra.mxu0 0
    %149 = vmatpush.bf16.msra.mxu0 0
    %150 = vmatpush.bf16.msra.mxu0 0
    %151 = vmatpush.bf16.msra.mxu0 0
    %152 = vmatpush.bf16.msra.mxu0 %v96
    %153 = vmatmul.bf16.gmra.mxu0 %v105
    %v154 = vpop.f32.mrf.mxu0
    %v155 = vadd.f32 %v56, %v154
    %v156 = vpop.f32.mrf.mxu0
    %v157 = vadd.f32 %v56, %v156
    %158 = vmatmul.bf16.gmra.mxu0 %v108
    %v159 = vpop.f32.mrf.mxu0
    %v160 = vadd.f32 %v56, %v159
    %v161 = vpop.f32.mrf.mxu0
    %v162 = vadd.f32 %v56, %v161
    %163 = vmatmul.bf16.gmra.mxu0 %v111
    %v164 = vpop.f32.mrf.mxu0
    %v165 = vadd.f32 %v56, %v164
    %v166 = vpop.f32.mrf.mxu0
    %v167 = vadd.f32 %v56, %v166
    %168 = vmatmul.bf16.gmra.mxu0 %v114
    %v169 = vpop.f32.mrf.mxu0
    %v170 = vadd.f32 %v56, %v169
    %v171 = vpop.f32.mrf.mxu0
    %v172 = vadd.f32 %v56, %v171
    %173 = vdwg.mxu0
    %174 = vmatpush.bf16.msra.mxu0 0
    %175 = vmatpush.bf16.msra.mxu0 0
    %176 = vmatpush.bf16.msra.mxu0 0
    %177 = vmatpush.bf16.msra.mxu0 0
    %178 = vmatpush.bf16.msra.mxu0 0
    %179 = vmatpush.bf16.msra.mxu0 0
    %180 = vmatpush.bf16.msra.mxu0 0
    %181 = vmatpush.bf16.msra.mxu0 %v97
    %182 = vmatmul.bf16.gmra.mxu0 %v105
    %v183 = vpop.f32.mrf.mxu0
    %v184 = vadd.f32 %v57, %v183
    %v185 = vpop.f32.mrf.mxu0
    %v186 = vadd.f32 %v57, %v185
    %187 = vmatmul.bf16.gmra.mxu0 %v108
    %v188 = vpop.f32.mrf.mxu0
    %v189 = vadd.f32 %v57, %v188
    %v190 = vpop.f32.mrf.mxu0
    %v191 = vadd.f32 %v57, %v190
    %192 = vmatmul.bf16.gmra.mxu0 %v111
    %v193 = vpop.f32.mrf.mxu0
    %v194 = vadd.f32 %v57, %v193
    %v195 = vpop.f32.mrf.mxu0
    %v196 = vadd.f32 %v57, %v195
    %197 = vmatmul.bf16.gmra.mxu0 %v114
    %v198 = vpop.f32.mrf.mxu0
    %v199 = vadd.f32 %v57, %v198
    %v200 = vpop.f32.mrf.mxu0
    %v201 = vadd.f32 %v57, %v200
    %202 = vdwg.mxu0
    %203 = vmatpush.bf16.msra.mxu0 0
    %204 = vmatpush.bf16.msra.mxu0 0
    %205 = vmatpush.bf16.msra.mxu0 0
    %206 = vmatpush.bf16.msra.mxu0 0
    %207 = vmatpush.bf16.msra.mxu0 0
    %208 = vmatpush.bf16.msra.mxu0 0
    %209 = vmatpush.bf16.msra.mxu0 0
    %210 = vmatpush.bf16.msra.mxu0 %v98
    %211 = vmatmul.bf16.gmra.mxu0 %v105
    %v212 = vpop.f32.mrf.mxu0
    %v213 = vadd.f32 %v58, %v212
    %v214 = vpop.f32.mrf.mxu0
    %v215 = vadd.f32 %v58, %v214
    %216 = vmatmul.bf16.gmra.mxu0 %v108
    %v217 = vpop.f32.mrf.mxu0
    %v218 = vadd.f32 %v58, %v217
    %v219 = vpop.f32.mrf.mxu0
    %v220 = vadd.f32 %v58, %v219
    %221 = vmatmul.bf16.gmra.mxu0 %v111
    %v222 = vpop.f32.mrf.mxu0
    %v223 = vadd.f32 %v58, %v222
    %v224 = vpop.f32.mrf.mxu0
    %v225 = vadd.f32 %v58, %v224
    %226 = vmatmul.bf16.gmra.mxu0 %v114
    %v227 = vpop.f32.mrf.mxu0
    %v228 = vadd.f32 %v58, %v227
    %v229 = vpop.f32.mrf.mxu0
    %v230 = vadd.f32 %v58, %v229
    %231 = vdwg.mxu0
    %v232 = vld [vmem:[#allocation2] sm:$0xff]
    %v233 = vld [vmem:[#allocation2 + $0x8] sm:$0xff]
    %v234 = vld [vmem:[#allocation2 + $0x10] sm:$0xff]
    %v235 = vld [vmem:[#allocation2 + $0x18] sm:$0xff]
    %v236 = vld [vmem:[#allocation2 + $0x20] sm:$0xff]
    %v237 = vld [vmem:[#allocation2 + $0x28] sm:$0xff]
    %v238 = vld [vmem:[#allocation2 + $0x30] sm:$0xff]
    %v239 = vld [vmem:[#allocation2 + $0x38] sm:$0xff]
    %v240 = vld [vmem:[#allocation2 + $0x40] sm:$0xff]
    %v241 = vld [vmem:[#allocation2 + $0x48] sm:$0xff]
    %v242 = vld [vmem:[#allocation2 + $0x50] sm:$0xff]
    %v243 = vld [vmem:[#allocation2 + $0x58] sm:$0xff]
    %v244 = vld [vmem:[#allocation2 + $0x60] sm:$0xff]
    %v245 = vld [vmem:[#allocation2 + $0x68] sm:$0xff]
    %v246 = vld [vmem:[#allocation2 + $0x70] sm:$0xff]
    %v247 = vld [vmem:[#allocation2 + $0x78] sm:$0xff]
    %v248 = vld [vmem:[#allocation2 + $0x80] sm:$0xff]
    %v249 = vld [vmem:[#allocation2 + $0x88] sm:$0xff]
    %v250 = vld [vmem:[#allocation2 + $0x90] sm:$0xff]
    %v251 = vld [vmem:[#allocation2 + $0x98] sm:$0xff]
    %v252 = vld [vmem:[#allocation2 + $0xa0] sm:$0xff]
    %v253 = vld [vmem:[#allocation2 + $0xa8] sm:$0xff]
    %v254 = vld [vmem:[#allocation2 + $0xb0] sm:$0xff]
    %v255 = vld [vmem:[#allocation2 + $0xb8] sm:$0xff]
    %v256 = vld [vmem:[#allocation2 + $0xc0] sm:$0xff]
    %v257 = vld [vmem:[#allocation2 + $0xc8] sm:$0xff]
    %v258 = vld [vmem:[#allocation2 + $0xd0] sm:$0xff]
    %v259 = vld [vmem:[#allocation2 + $0xd8] sm:$0xff]
    %v260 = vld [vmem:[#allocation2 + $0xe0] sm:$0xff]
    %v261 = vld [vmem:[#allocation2 + $0xe8] sm:$0xff]
    %v262 = vld [vmem:[#allocation2 + $0xf0] sm:$0xff]
    %v263 = vld [vmem:[#allocation2 + $0xf8] sm:$0xff]
    %v296 = vunpack.c.l.b16 %v232
    %v297 = vunpack.c.h.b16 %v232
    %v298 = vunpack.c.l.b16 %v233
    %v299 = vunpack.c.h.b16 %v233
    %v300 = vunpack.c.l.b16 %v234
    %v301 = vunpack.c.h.b16 %v234
    %v302 = vunpack.c.l.b16 %v235
    %v303 = vunpack.c.h.b16 %v235
    %v304 = vunpack.c.l.b16 %v236
    %v305 = vunpack.c.h.b16 %v236
    %v306 = vunpack.c.l.b16 %v237
    %v307 = vunpack.c.h.b16 %v237
    %v308 = vunpack.c.l.b16 %v238
    %v309 = vunpack.c.h.b16 %v238
    %v310 = vunpack.c.l.b16 %v239
    %v311 = vunpack.c.h.b16 %v239
    %v312 = vunpack.c.l.b16 %v240
    %v313 = vunpack.c.h.b16 %v240
    %v314 = vunpack.c.l.b16 %v241
    %v315 = vunpack.c.h.b16 %v241
    %v316 = vunpack.c.l.b16 %v242
    %v317 = vunpack.c.h.b16 %v242
    %v318 = vunpack.c.l.b16 %v243
    %v319 = vunpack.c.h.b16 %v243
    %v320 = vunpack.c.l.b16 %v244
    %v321 = vunpack.c.h.b16 %v244
    %v322 = vunpack.c.l.b16 %v245
    %v323 = vunpack.c.h.b16 %v245
    %v324 = vunpack.c.l.b16 %v246
    %v325 = vunpack.c.h.b16 %v246
    %v326 = vunpack.c.l.b16 %v247
    %v327 = vunpack.c.h.b16 %v247
    %v328 = vunpack.c.l.b16 %v248
    %v329 = vunpack.c.h.b16 %v248
    %v330 = vunpack.c.l.b16 %v249
    %v331 = vunpack.c.h.b16 %v249
    %v332 = vunpack.c.l.b16 %v250
    %v333 = vunpack.c.h.b16 %v250
    %v334 = vunpack.c.l.b16 %v251
    %v335 = vunpack.c.h.b16 %v251
    %v336 = vunpack.c.l.b16 %v252
    %v337 = vunpack.c.h.b16 %v252
    %v338 = vunpack.c.l.b16 %v253
    %v339 = vunpack.c.h.b16 %v253
    %v340 = vunpack.c.l.b16 %v254
    %v341 = vunpack.c.h.b16 %v254
    %v342 = vunpack.c.l.b16 %v255
    %v343 = vunpack.c.h.b16 %v255
    %v344 = vunpack.c.l.b16 %v256
    %v345 = vunpack.c.h.b16 %v256
    %v346 = vunpack.c.l.b16 %v257
    %v347 = vunpack.c.h.b16 %v257
    %v348 = vunpack.c.l.b16 %v258
    %v349 = vunpack.c.h.b16 %v258
    %v350 = vunpack.c.l.b16 %v259
    %v351 = vunpack.c.h.b16 %v259
    %v352 = vunpack.c.l.b16 %v260
    %v353 = vunpack.c.h.b16 %v260
    %v354 = vunpack.c.l.b16 %v261
    %v355 = vunpack.c.h.b16 %v261
    %v356 = vunpack.c.l.b16 %v262
    %v357 = vunpack.c.h.b16 %v262
    %v358 = vunpack.c.l.b16 %v263
    %v359 = vunpack.c.h.b16 %v263
    %v360 = vpack.c.b16 %v300, %v296
    %v361 = vpack.c.b16 %v301, %v297
    %v362 = vpack.c.b16 %v302, %v298
    %v363 = vpack.c.b16 %v303, %v299
    %v364 = vpack.c.b16 %v308, %v304
    %v365 = vpack.c.b16 %v309, %v305
    %v366 = vpack.c.b16 %v310, %v306
    %v367 = vpack.c.b16 %v311, %v307
    %v368 = vpack.c.b16 %v316, %v312
    %v369 = vpack.c.b16 %v317, %v313
    %v370 = vpack.c.b16 %v318, %v314
    %v371 = vpack.c.b16 %v319, %v315
    %v372 = vpack.c.b16 %v324, %v320
    %v373 = vpack.c.b16 %v325, %v321
    %v374 = vpack.c.b16 %v326, %v322
    %v375 = vpack.c.b16 %v327, %v323
    %v376 = vpack.c.b16 %v332, %v328
    %v377 = vpack.c.b16 %v333, %v329
    %v378 = vpack.c.b16 %v334, %v330
    %v379 = vpack.c.b16 %v335, %v331
    %v380 = vpack.c.b16 %v340, %v336
    %v381 = vpack.c.b16 %v341, %v337
    %v382 = vpack.c.b16 %v342, %v338
    %v383 = vpack.c.b16 %v343, %v339
    %v384 = vpack.c.b16 %v348, %v344
    %v385 = vpack.c.b16 %v349, %v345
    %v386 = vpack.c.b16 %v350, %v346
    %v387 = vpack.c.b16 %v351, %v347
    %v388 = vpack.c.b16 %v356, %v352
    %v389 = vpack.c.b16 %v357, %v353
    %v390 = vpack.c.b16 %v358, %v354
    %v391 = vpack.c.b16 %v359, %v355
    %424 = vmatpush.bf16.msra.mxu0 %v388
    %425 = vmatpush.bf16.msra.mxu0 %v384
    %426 = vmatpush.bf16.msra.mxu0 %v380
    %427 = vmatpush.bf16.msra.mxu0 %v376
    %428 = vmatpush.bf16.msra.mxu0 %v372
    %429 = vmatpush.bf16.msra.mxu0 %v368
    %430 = vmatpush.bf16.msra.mxu0 %v364
    %431 = vmatpush.bf16.msra.mxu0 %v360
    %432 = vmatmul.bf16.gmra.mxu0 0
    %v433 = vpop.f32.mrf.mxu0
    %v434 = vadd.f32 0.0, %v433
    %v435 = vpop.f32.mrf.mxu0
    %436 = vdwg.mxu0
    %437 = vmatpush.bf16.msra.mxu0 %v389
    %438 = vmatpush.bf16.msra.mxu0 %v385
    %439 = vmatpush.bf16.msra.mxu0 %v381
    %440 = vmatpush.bf16.msra.mxu0 %v377
    %441 = vmatpush.bf16.msra.mxu0 %v373
    %442 = vmatpush.bf16.msra.mxu0 %v369
    %443 = vmatpush.bf16.msra.mxu0 %v365
    %444 = vmatpush.bf16.msra.mxu0 %v361
    %445 = vmatmul.bf16.gmra.mxu0 0
    %v446 = vpop.f32.mrf.mxu0
    %v447 = vadd.f32 0.0, %v446
    %v448 = vpop.f32.mrf.mxu0
    %449 = vdwg.mxu0
    %450 = vmatpush.bf16.msra.mxu0 %v390
    %451 = vmatpush.bf16.msra.mxu0 %v386
    %452 = vmatpush.bf16.msra.mxu0 %v382
    %453 = vmatpush.bf16.msra.mxu0 %v378
    %454 = vmatpush.bf16.msra.mxu0 %v374
    %455 = vmatpush.bf16.msra.mxu0 %v370
    %456 = vmatpush.bf16.msra.mxu0 %v366
    %457 = vmatpush.bf16.msra.mxu0 %v362
    %458 = vmatmul.bf16.gmra.mxu0 0
    %v459 = vpop.f32.mrf.mxu0
    %v460 = vadd.f32 0.0, %v459
    %v461 = vpop.f32.mrf.mxu0
    %462 = vdwg.mxu0
    %463 = vmatpush.bf16.msra.mxu0 %v391
    %464 = vmatpush.bf16.msra.mxu0 %v387
    %465 = vmatpush.bf16.msra.mxu0 %v383
    %466 = vmatpush.bf16.msra.mxu0 %v379
    %467 = vmatpush.bf16.msra.mxu0 %v375
    %468 = vmatpush.bf16.msra.mxu0 %v371
    %469 = vmatpush.bf16.msra.mxu0 %v367
    %470 = vmatpush.bf16.msra.mxu0 %v363
    %471 = vmatmul.bf16.gmra.mxu0 0
    %v472 = vpop.f32.mrf.mxu0
    %v473 = vadd.f32 0.0, %v472
    %v474 = vpop.f32.mrf.mxu0
    %475 = vdwg.mxu0
    %v476 = vadd.f32 %v126, %v434
    %v477 = vadd.f32 %v155, %v447
    %v478 = vadd.f32 %v184, %v460
    %v479 = vadd.f32 %v213, %v473
    %v480 = vtanh.pop %v476
    %v481 = vtanh.pop %v477
    %v482 = vtanh.pop %v478
    %v483 = vtanh.pop %v479
    %v484 = vmul.f32 %v480, 0.5
    %v485 = vadd.f32 %v484, 0.5
    %v486 = vmul.f32 %v481, 0.5
    %v487 = vadd.f32 %v486, 0.5
    %v488 = vmul.f32 %v483, 0.5
    %v489 = vadd.f32 %v488, 0.5
    %v490 = vmul.f32 %v487, 0.0
    %v491 = vmul.f32 %v485, %v482
    %v492 = vadd.f32 %v490, %v491
    %v493 = vtanh.pop %v492
    %v494 = vmul.f32 %v489, %v493
    %v495 = vpack.c.bf16 %v494, %v494
    %496 = vmatpush.bf16.msra.mxu0 %v388
    %497 = vmatpush.bf16.msra.mxu0 %v384
    %498 = vmatpush.bf16.msra.mxu0 %v380
    %499 = vmatpush.bf16.msra.mxu0 %v376
    %500 = vmatpush.bf16.msra.mxu0 %v372
    %501 = vmatpush.bf16.msra.mxu0 %v368
    %502 = vmatpush.bf16.msra.mxu0 %v364
    %503 = vmatpush.bf16.msra.mxu0 %v360
    %504 = vmatmul.bf16.gmra.mxu0 %v495
    %v505 = vpop.f32.mrf.mxu0
    %v506 = vadd.f32 0.0, %v505
    %v507 = vpop.f32.mrf.mxu0
    %508 = vdwg.mxu0
    %509 = vmatpush.bf16.msra.mxu0 %v389
    %510 = vmatpush.bf16.msra.mxu0 %v385
    %511 = vmatpush.bf16.msra.mxu0 %v381
    %512 = vmatpush.bf16.msra.mxu0 %v377
    %513 = vmatpush.bf16.msra.mxu0 %v373
    %514 = vmatpush.bf16.msra.mxu0 %v369
    %515 = vmatpush.bf16.msra.mxu0 %v365
    %516 = vmatpush.bf16.msra.mxu0 %v361
    %517 = vmatmul.bf16.gmra.mxu0 %v495
    %v518 = vpop.f32.mrf.mxu0
    %v519 = vadd.f32 0.0, %v518
    %v520 = vpop.f32.mrf.mxu0
    %521 = vdwg.mxu0
    %522 = vmatpush.bf16.msra.mxu0 %v390
    %523 = vmatpush.bf16.msra.mxu0 %v386
    %524 = vmatpush.bf16.msra.mxu0 %v382
    %525 = vmatpush.bf16.msra.mxu0 %v378
    %526 = vmatpush.bf16.msra.mxu0 %v374
    %527 = vmatpush.bf16.msra.mxu0 %v370
    %528 = vmatpush.bf16.msra.mxu0 %v366
    %529 = vmatpush.bf16.msra.mxu0 %v362
    %530 = vmatmul.bf16.gmra.mxu0 %v495
    %v531 = vpop.f32.mrf.mxu0
    %v532 = vadd.f32 0.0, %v531
    %v533 = vpop.f32.mrf.mxu0
    %534 = vdwg.mxu0
    %535 = vmatpush.bf16.msra.mxu0 %v391
    %536 = vmatpush.bf16.msra.mxu0 %v387
    %537 = vmatpush.bf16.msra.mxu0 %v383
    %538 = vmatpush.bf16.msra.mxu0 %v379
    %539 = vmatpush.bf16.msra.mxu0 %v375
    %540 = vmatpush.bf16.msra.mxu0 %v371
    %541 = vmatpush.bf16.msra.mxu0 %v367
    %542 = vmatpush.bf16.msra.mxu0 %v363
    %543 = vmatmul.bf16.gmra.mxu0 %v495
    %v544 = vpop.f32.mrf.mxu0
    %v545 = vadd.f32 0.0, %v544
    %v546 = vpop.f32.mrf.mxu0
    %547 = vdwg.mxu0
    %v548 = vadd.f32 %v128, %v506
    %v549 = vadd.f32 %v157, %v519
    %v550 = vadd.f32 %v186, %v532
    %v551 = vadd.f32 %v215, %v545
    %v552 = vtanh.pop %v548
    %v553 = vtanh.pop %v549
    %v554 = vtanh.pop %v550
    %v555 = vtanh.pop %v551
    %v556 = vmul.f32 %v552, 0.5
    %v557 = vadd.f32 %v556, 0.5
    %v558 = vmul.f32 %v553, 0.5
    %v559 = vadd.f32 %v558, 0.5
    %v560 = vmul.f32 %v555, 0.5
    %v561 = vadd.f32 %v560, 0.5
    %v562 = vmul.f32 %v559, %v492
    %v563 = vmul.f32 %v557, %v554
    %v564 = vadd.f32 %v562, %v563
    %v565 = vtanh.pop %v564
    %v566 = vmul.f32 %v561, %v565
    %v567 = vpack.c.bf16 %v566, %v566
    %568 = vmatpush.bf16.msra.mxu0 %v388
    %569 = vmatpush.bf16.msra.mxu0 %v384
    %570 = vmatpush.bf16.msra.mxu0 %v380
    %571 = vmatpush.bf16.msra.mxu0 %v376
    %572 = vmatpush.bf16.msra.mxu0 %v372
    %573 = vmatpush.bf16.msra.mxu0 %v368
    %574 = vmatpush.bf16.msra.mxu0 %v364
    %575 = vmatpush.bf16.msra.mxu0 %v360
    %576 = vmatmul.bf16.gmra.mxu0 %v567
    %v577 = vpop.f32.mrf.mxu0
    %v578 = vadd.f32 0.0, %v577
    %v579 = vpop.f32.mrf.mxu0
    %580 = vdwg.mxu0
    %581 = vmatpush.bf16.msra.mxu0 %v389
    %582 = vmatpush.bf16.msra.mxu0 %v385
    %583 = vmatpush.bf16.msra.mxu0 %v381
    %584 = vmatpush.bf16.msra.mxu0 %v377
    %585 = vmatpush.bf16.msra.mxu0 %v373
    %586 = vmatpush.bf16.msra.mxu0 %v369
    %587 = vmatpush.bf16.msra.mxu0 %v365
    %588 = vmatpush.bf16.msra.mxu0 %v361
    %589 = vmatmul.bf16.gmra.mxu0 %v567
    %v590 = vpop.f32.mrf.mxu0
    %v591 = vadd.f32 0.0, %v590
    %v592 = vpop.f32.mrf.mxu0
    %593 = vdwg.mxu0
    %594 = vmatpush.bf16.msra.mxu0 %v390
    %595 = vmatpush.bf16.msra.mxu0 %v386
    %596 = vmatpush.bf16.msra.mxu0 %v382
    %597 = vmatpush.bf16.msra.mxu0 %v378
    %598 = vmatpush.bf16.msra.mxu0 %v374
    %599 = vmatpush.bf16.msra.mxu0 %v370
    %600 = vmatpush.bf16.msra.mxu0 %v366
    %601 = vmatpush.bf16.msra.mxu0 %v362
    %602 = vmatmul.bf16.gmra.mxu0 %v567
    %v603 = vpop.f32.mrf.mxu0
    %v604 = vadd.f32 0.0, %v603
    %v605 = vpop.f32.mrf.mxu0
    %606 = vdwg.mxu0
    %607 = vmatpush.bf16.msra.mxu0 %v391
    %608 = vmatpush.bf16.msra.mxu0 %v387
    %609 = vmatpush.bf16.msra.mxu0 %v383
    %610 = vmatpush.bf16.msra.mxu0 %v379
    %611 = vmatpush.bf16.msra.mxu0 %v375
    %612 = vmatpush.bf16.msra.mxu0 %v371
    %613 = vmatpush.bf16.msra.mxu0 %v367
    %614 = vmatpush.bf16.msra.mxu0 %v363
    %615 = vmatmul.bf16.gmra.mxu0 %v567
    %v616 = vpop.f32.mrf.mxu0
    %v617 = vadd.f32 0.0, %v616
    %v618 = vpop.f32.mrf.mxu0
    %619 = vdwg.mxu0
    %v620 = vadd.f32 %v131, %v578
    %v621 = vadd.f32 %v160, %v591
    %v622 = vadd.f32 %v189, %v604
    %v623 = vadd.f32 %v218, %v617
    %v624 = vtanh.pop %v620
    %v625 = vtanh.pop %v621
    %v626 = vtanh.pop %v622
    %v627 = vtanh.pop %v623
    %v628 = vmul.f32 %v624, 0.5
    %v629 = vadd.f32 %v628, 0.5
    %v630 = vmul.f32 %v625, 0.5
    %v631 = vadd.f32 %v630, 0.5
    %v632 = vmul.f32 %v627, 0.5
    %v633 = vadd.f32 %v632, 0.5
    %v634 = vmul.f32 %v631, %v564
    %v635 = vmul.f32 %v629, %v626
    %v636 = vadd.f32 %v634, %v635
    %v637 = vtanh.pop %v636
    %v638 = vmul.f32 %v633, %v637
    %v639 = vpack.c.bf16 %v638, %v638
    %640 = vmatpush.bf16.msra.mxu0 %v388
    %641 = vmatpush.bf16.msra.mxu0 %v384
    %642 = vmatpush.bf16.msra.mxu0 %v380
    %643 = vmatpush.bf16.msra.mxu0 %v376
    %644 = vmatpush.bf16.msra.mxu0 %v372
    %645 = vmatpush.bf16.msra.mxu0 %v368
    %646 = vmatpush.bf16.msra.mxu0 %v364
    %647 = vmatpush.bf16.msra.mxu0 %v360
    %648 = vmatmul.bf16.gmra.mxu0 %v639
    %v649 = vpop.f32.mrf.mxu0
    %v650 = vadd.f32 0.0, %v649
    %v651 = vpop.f32.mrf.mxu0
    %652 = vdwg.mxu0
    %653 = vmatpush.bf16.msra.mxu0 %v389
    %654 = vmatpush.bf16.msra.mxu0 %v385
    %655 = vmatpush.bf16.msra.mxu0 %v381
    %656 = vmatpush.bf16.msra.mxu0 %v377
    %657 = vmatpush.bf16.msra.mxu0 %v373
    %658 = vmatpush.bf16.msra.mxu0 %v369
    %659 = vmatpush.bf16.msra.mxu0 %v365
    %660 = vmatpush.bf16.msra.mxu0 %v361
    %661 = vmatmul.bf16.gmra.mxu0 %v639
    %v662 = vpop.f32.mrf.mxu0
    %v663 = vadd.f32 0.0, %v662
    %v664 = vpop.f32.mrf.mxu0
    %665 = vdwg.mxu0
    %666 = vmatpush.bf16.msra.mxu0 %v390
    %667 = vmatpush.bf16.msra.mxu0 %v386
    %668 = vmatpush.bf16.msra.mxu0 %v382
    %669 = vmatpush.bf16.msra.mxu0 %v378
    %670 = vmatpush.bf16.msra.mxu0 %v374
    %671 = vmatpush.bf16.msra.mxu0 %v370
    %672 = vmatpush.bf16.msra.mxu0 %v366
    %673 = vmatpush.bf16.msra.mxu0 %v362
    %674 = vmatmul.bf16.gmra.mxu0 %v639
    %v675 = vpop.f32.mrf.mxu0
    %v676 = vadd.f32 0.0, %v675
    %v677 = vpop.f32.mrf.mxu0
    %678 = vdwg.mxu0
    %679 = vmatpush.bf16.msra.mxu0 %v391
    %680 = vmatpush.bf16.msra.mxu0 %v387
    %681 = vmatpush.bf16.msra.mxu0 %v383
    %682 = vmatpush.bf16.msra.mxu0 %v379
    %683 = vmatpush.bf16.msra.mxu0 %v375
    %684 = vmatpush.bf16.msra.mxu0 %v371
    %685 = vmatpush.bf16.msra.mxu0 %v367
    %686 = vmatpush.bf16.msra.mxu0 %v363
    %687 = vmatmul.bf16.gmra.mxu0 %v639
    %v688 = vpop.f32.mrf.mxu0
    %v689 = vadd.f32 0.0, %v688
    %v690 = vpop.f32.mrf.mxu0
    %691 = vdwg.mxu0
    %v692 = vadd.f32 %v133, %v650
    %v693 = vadd.f32 %v162, %v663
    %v694 = vadd.f32 %v191, %v676
    %v695 = vadd.f32 %v220, %v689
    %v696 = vtanh.pop %v692
    %v697 = vtanh.pop %v693
    %v698 = vtanh.pop %v694
    %v699 = vtanh.pop %v695
    %v700 = vmul.f32 %v696, 0.5
    %v701 = vadd.f32 %v700, 0.5
    %v702 = vmul.f32 %v697, 0.5
    %v703 = vadd.f32 %v702, 0.5
    %v704 = vmul.f32 %v699, 0.5
    %v705 = vadd.f32 %v704, 0.5
    %v706 = vmul.f32 %v703, %v636
    %v707 = vmul.f32 %v701, %v698
    %v708 = vadd.f32 %v706, %v707
    %v709 = vtanh.pop %v708
    %v710 = vmul.f32 %v705, %v709
    %v711 = vpack.c.bf16 %v710, %v710
    %712 = vmatpush.bf16.msra.mxu0 %v388
    %713 = vmatpush.bf16.msra.mxu0 %v384
    %714 = vmatpush.bf16.msra.mxu0 %v380
    %715 = vmatpush.bf16.msra.mxu0 %v376
    %716 = vmatpush.bf16.msra.mxu0 %v372
    %717 = vmatpush.bf16.msra.mxu0 %v368
    %718 = vmatpush.bf16.msra.mxu0 %v364
    %719 = vmatpush.bf16.msra.mxu0 %v360
    %720 = vmatmul.bf16.gmra.mxu0 %v711
    %v721 = vpop.f32.mrf.mxu0
    %v722 = vadd.f32 0.0, %v721
    %v723 = vpop.f32.mrf.mxu0
    %724 = vdwg.mxu0
    %725 = vmatpush.bf16.msra.mxu0 %v389
    %726 = vmatpush.bf16.msra.mxu0 %v385
    %727 = vmatpush.bf16.msra.mxu0 %v381
    %728 = vmatpush.bf16.msra.mxu0 %v377
    %729 = vmatpush.bf16.msra.mxu0 %v373
    %730 = vmatpush.bf16.msra.mxu0 %v369
    %731 = vmatpush.bf16.msra.mxu0 %v365
    %732 = vmatpush.bf16.msra.mxu0 %v361
    %733 = vmatmul.bf16.gmra.mxu0 %v711
    %v734 = vpop.f32.mrf.mxu0
    %v735 = vadd.f32 0.0, %v734
    %v736 = vpop.f32.mrf.mxu0
    %737 = vdwg.mxu0
    %738 = vmatpush.bf16.msra.mxu0 %v390
    %739 = vmatpush.bf16.msra.mxu0 %v386
    %740 = vmatpush.bf16.msra.mxu0 %v382
    %741 = vmatpush.bf16.msra.mxu0 %v378
    %742 = vmatpush.bf16.msra.mxu0 %v374
    %743 = vmatpush.bf16.msra.mxu0 %v370
    %744 = vmatpush.bf16.msra.mxu0 %v366
    %745 = vmatpush.bf16.msra.mxu0 %v362
    %746 = vmatmul.bf16.gmra.mxu0 %v711
    %v747 = vpop.f32.mrf.mxu0
    %v748 = vadd.f32 0.0, %v747
    %v749 = vpop.f32.mrf.mxu0
    %750 = vdwg.mxu0
    %751 = vmatpush.bf16.msra.mxu0 %v391
    %752 = vmatpush.bf16.msra.mxu0 %v387
    %753 = vmatpush.bf16.msra.mxu0 %v383
    %754 = vmatpush.bf16.msra.mxu0 %v379
    %755 = vmatpush.bf16.msra.mxu0 %v375
    %756 = vmatpush.bf16.msra.mxu0 %v371
    %757 = vmatpush.bf16.msra.mxu0 %v367
    %758 = vmatpush.bf16.msra.mxu0 %v363
    %759 = vmatmul.bf16.gmra.mxu0 %v711
    %v760 = vpop.f32.mrf.mxu0
    %v761 = vadd.f32 0.0, %v760
    %v762 = vpop.f32.mrf.mxu0
    %763 = vdwg.mxu0
    %v764 = vadd.f32 %v136, %v722
    %v765 = vadd.f32 %v165, %v735
    %v766 = vadd.f32 %v194, %v748
    %v767 = vadd.f32 %v223, %v761
    %v768 = vtanh.pop %v764
    %v769 = vtanh.pop %v765
    %v770 = vtanh.pop %v766
    %v771 = vtanh.pop %v767
    %v772 = vmul.f32 %v768, 0.5
    %v773 = vadd.f32 %v772, 0.5
    %v774 = vmul.f32 %v769, 0.5
    %v775 = vadd.f32 %v774, 0.5
    %v776 = vmul.f32 %v771, 0.5
    %v777 = vadd.f32 %v776, 0.5
    %v778 = vmul.f32 %v775, %v708
    %v779 = vmul.f32 %v773, %v770
    %v780 = vadd.f32 %v778, %v779
    %v781 = vtanh.pop %v780
    %v782 = vmul.f32 %v777, %v781
    %v783 = vpack.c.bf16 %v782, %v782
    %784 = vmatpush.bf16.msra.mxu0 %v388
    %785 = vmatpush.bf16.msra.mxu0 %v384
    %786 = vmatpush.bf16.msra.mxu0 %v380
    %787 = vmatpush.bf16.msra.mxu0 %v376
    %788 = vmatpush.bf16.msra.mxu0 %v372
    %789 = vmatpush.bf16.msra.mxu0 %v368
    %790 = vmatpush.bf16.msra.mxu0 %v364
    %791 = vmatpush.bf16.msra.mxu0 %v360
    %792 = vmatmul.bf16.gmra.mxu0 %v783
    %v793 = vpop.f32.mrf.mxu0
    %v794 = vadd.f32 0.0, %v793
    %v795 = vpop.f32.mrf.mxu0
    %796 = vdwg.mxu0
    %797 = vmatpush.bf16.msra.mxu0 %v389
    %798 = vmatpush.bf16.msra.mxu0 %v385
    %799 = vmatpush.bf16.msra.mxu0 %v381
    %800 = vmatpush.bf16.msra.mxu0 %v377
    %801 = vmatpush.bf16.msra.mxu0 %v373
    %802 = vmatpush.bf16.msra.mxu0 %v369
    %803 = vmatpush.bf16.msra.mxu0 %v365
    %804 = vmatpush.bf16.msra.mxu0 %v361
    %805 = vmatmul.bf16.gmra.mxu0 %v783
    %v806 = vpop.f32.mrf.mxu0
    %v807 = vadd.f32 0.0, %v806
    %v808 = vpop.f32.mrf.mxu0
    %809 = vdwg.mxu0
    %810 = vmatpush.bf16.msra.mxu0 %v390
    %811 = vmatpush.bf16.msra.mxu0 %v386
    %812 = vmatpush.bf16.msra.mxu0 %v382
    %813 = vmatpush.bf16.msra.mxu0 %v378
    %814 = vmatpush.bf16.msra.mxu0 %v374
    %815 = vmatpush.bf16.msra.mxu0 %v370
    %816 = vmatpush.bf16.msra.mxu0 %v366
    %817 = vmatpush.bf16.msra.mxu0 %v362
    %818 = vmatmul.bf16.gmra.mxu0 %v783
    %v819 = vpop.f32.mrf.mxu0
    %v820 = vadd.f32 0.0, %v819
    %v821 = vpop.f32.mrf.mxu0
    %822 = vdwg.mxu0
    %823 = vmatpush.bf16.msra.mxu0 %v391
    %824 = vmatpush.bf16.msra.mxu0 %v387
    %825 = vmatpush.bf16.msra.mxu0 %v383
    %826 = vmatpush.bf16.msra.mxu0 %v379
    %827 = vmatpush.bf16.msra.mxu0 %v375
    %828 = vmatpush.bf16.msra.mxu0 %v371
    %829 = vmatpush.bf16.msra.mxu0 %v367
    %830 = vmatpush.bf16.msra.mxu0 %v363
    %831 = vmatmul.bf16.gmra.mxu0 %v783
    %v832 = vpop.f32.mrf.mxu0
    %v833 = vadd.f32 0.0, %v832
    %v834 = vpop.f32.mrf.mxu0
    %835 = vdwg.mxu0
    %v836 = vadd.f32 %v138, %v794
    %v837 = vadd.f32 %v167, %v807
    %v838 = vadd.f32 %v196, %v820
    %v839 = vadd.f32 %v225, %v833
    %v840 = vtanh.pop %v836
    %v841 = vtanh.pop %v837
    %v842 = vtanh.pop %v838
    %v843 = vtanh.pop %v839
    %v844 = vmul.f32 %v840, 0.5
    %v845 = vadd.f32 %v844, 0.5
    %v846 = vmul.f32 %v841, 0.5
    %v847 = vadd.f32 %v846, 0.5
    %v848 = vmul.f32 %v843, 0.5
    %v849 = vadd.f32 %v848, 0.5
    %v850 = vmul.f32 %v847, %v780
    %v851 = vmul.f32 %v845, %v842
    %v852 = vadd.f32 %v850, %v851
    %v853 = vtanh.pop %v852
    %v854 = vmul.f32 %v849, %v853
    %v855 = vpack.c.bf16 %v854, %v854
    %856 = vmatpush.bf16.msra.mxu0 %v388
    %857 = vmatpush.bf16.msra.mxu0 %v384
    %858 = vmatpush.bf16.msra.mxu0 %v380
    %859 = vmatpush.bf16.msra.mxu0 %v376
    %860 = vmatpush.bf16.msra.mxu0 %v372
    %861 = vmatpush.bf16.msra.mxu0 %v368
    %862 = vmatpush.bf16.msra.mxu0 %v364
    %863 = vmatpush.bf16.msra.mxu0 %v360
    %864 = vmatmul.bf16.gmra.mxu0 %v855
    %v865 = vpop.f32.mrf.mxu0
    %v866 = vadd.f32 0.0, %v865
    %v867 = vpop.f32.mrf.mxu0
    %868 = vdwg.mxu0
    %869 = vmatpush.bf16.msra.mxu0 %v389
    %870 = vmatpush.bf16.msra.mxu0 %v385
    %871 = vmatpush.bf16.msra.mxu0 %v381
    %872 = vmatpush.bf16.msra.mxu0 %v377
    %873 = vmatpush.bf16.msra.mxu0 %v373
    %874 = vmatpush.bf16.msra.mxu0 %v369
    %875 = vmatpush.bf16.msra.mxu0 %v365
    %876 = vmatpush.bf16.msra.mxu0 %v361
    %877 = vmatmul.bf16.gmra.mxu0 %v855
    %v878 = vpop.f32.mrf.mxu0
    %v879 = vadd.f32 0.0, %v878
    %v880 = vpop.f32.mrf.mxu0
    %881 = vdwg.mxu0
    %882 = vmatpush.bf16.msra.mxu0 %v390
    %883 = vmatpush.bf16.msra.mxu0 %v386
    %884 = vmatpush.bf16.msra.mxu0 %v382
    %885 = vmatpush.bf16.msra.mxu0 %v378
    %886 = vmatpush.bf16.msra.mxu0 %v374
    %887 = vmatpush.bf16.msra.mxu0 %v370
    %888 = vmatpush.bf16.msra.mxu0 %v366
    %889 = vmatpush.bf16.msra.mxu0 %v362
    %890 = vmatmul.bf16.gmra.mxu0 %v855
    %v891 = vpop.f32.mrf.mxu0
    %v892 = vadd.f32 0.0, %v891
    %v893 = vpop.f32.mrf.mxu0
    %894 = vdwg.mxu0
    %895 = vmatpush.bf16.msra.mxu0 %v391
    %896 = vmatpush.bf16.msra.mxu0 %v387
    %897 = vmatpush.bf16.msra.mxu0 %v383
    %898 = vmatpush.bf16.msra.mxu0 %v379
    %899 = vmatpush.bf16.msra.mxu0 %v375
    %900 = vmatpush.bf16.msra.mxu0 %v371
    %901 = vmatpush.bf16.msra.mxu0 %v367
    %902 = vmatpush.bf16.msra.mxu0 %v363
    %903 = vmatmul.bf16.gmra.mxu0 %v855
    %v904 = vpop.f32.mrf.mxu0
    %v905 = vadd.f32 0.0, %v904
    %v906 = vpop.f32.mrf.mxu0
    %907 = vdwg.mxu0
    %v908 = vadd.f32 %v141, %v866
    %v909 = vadd.f32 %v170, %v879
    %v910 = vadd.f32 %v199, %v892
    %v911 = vadd.f32 %v228, %v905
    %v912 = vtanh.pop %v908
    %v913 = vtanh.pop %v909
    %v914 = vtanh.pop %v910
    %v915 = vtanh.pop %v911
    %v916 = vmul.f32 %v912, 0.5
    %v917 = vadd.f32 %v916, 0.5
    %v918 = vmul.f32 %v913, 0.5
    %v919 = vadd.f32 %v918, 0.5
    %v920 = vmul.f32 %v915, 0.5
    %v921 = vadd.f32 %v920, 0.5
    %v922 = vmul.f32 %v919, %v852
    %v923 = vmul.f32 %v917, %v914
    %v924 = vadd.f32 %v922, %v923
    %v925 = vtanh.pop %v924
    %v926 = vmul.f32 %v921, %v925
    %v927 = vpack.c.bf16 %v926, %v926
    %928 = vmatpush.bf16.msra.mxu0 %v388
    %929 = vmatpush.bf16.msra.mxu0 %v384
    %930 = vmatpush.bf16.msra.mxu0 %v380
    %931 = vmatpush.bf16.msra.mxu0 %v376
    %932 = vmatpush.bf16.msra.mxu0 %v372
    %933 = vmatpush.bf16.msra.mxu0 %v368
    %934 = vmatpush.bf16.msra.mxu0 %v364
    %935 = vmatpush.bf16.msra.mxu0 %v360
    %936 = vmatmul.bf16.gmra.mxu0 %v927
    %v937 = vpop.f32.mrf.mxu0
    %v938 = vadd.f32 0.0, %v937
    %v939 = vpop.f32.mrf.mxu0
    %940 = vdwg.mxu0
    %941 = vmatpush.bf16.msra.mxu0 %v389
    %942 = vmatpush.bf16.msra.mxu0 %v385
    %943 = vmatpush.bf16.msra.mxu0 %v381
    %944 = vmatpush.bf16.msra.mxu0 %v377
    %945 = vmatpush.bf16.msra.mxu0 %v373
    %946 = vmatpush.bf16.msra.mxu0 %v369
    %947 = vmatpush.bf16.msra.mxu0 %v365
    %948 = vmatpush.bf16.msra.mxu0 %v361
    %949 = vmatmul.bf16.gmra.mxu0 %v927
    %v950 = vpop.f32.mrf.mxu0
    %v951 = vadd.f32 0.0, %v950
    %v952 = vpop.f32.mrf.mxu0
    %953 = vdwg.mxu0
    %954 = vmatpush.bf16.msra.mxu0 %v390
    %955 = vmatpush.bf16.msra.mxu0 %v386
    %956 = vmatpush.bf16.msra.mxu0 %v382
    %957 = vmatpush.bf16.msra.mxu0 %v378
    %958 = vmatpush.bf16.msra.mxu0 %v374
    %959 = vmatpush.bf16.msra.mxu0 %v370
    %960 = vmatpush.bf16.msra.mxu0 %v366
    %961 = vmatpush.bf16.msra.mxu0 %v362
    %962 = vmatmul.bf16.gmra.mxu0 %v927
    %v963 = vpop.f32.mrf.mxu0
    %v964 = vadd.f32 0.0, %v963
    %v965 = vpop.f32.mrf.mxu0
    %966 = vdwg.mxu0
    %967 = vmatpush.bf16.msra.mxu0 %v391
    %968 = vmatpush.bf16.msra.mxu0 %v387
    %969 = vmatpush.bf16.msra.mxu0 %v383
    %970 = vmatpush.bf16.msra.mxu0 %v379
    %971 = vmatpush.bf16.msra.mxu0 %v375
    %972 = vmatpush.bf16.msra.mxu0 %v371
    %973 = vmatpush.bf16.msra.mxu0 %v367
    %974 = vmatpush.bf16.msra.mxu0 %v363
    %975 = vmatmul.bf16.gmra.mxu0 %v927
    %v976 = vpop.f32.mrf.mxu0
    %v977 = vadd.f32 0.0, %v976
    %v978 = vpop.f32.mrf.mxu0
    %979 = vdwg.mxu0
    %v980 = vadd.f32 %v143, %v938
    %v981 = vadd.f32 %v172, %v951
    %v982 = vadd.f32 %v201, %v964
    %v983 = vadd.f32 %v230, %v977
    %v984 = vtanh.pop %v980
    %v985 = vtanh.pop %v981
    %v986 = vtanh.pop %v982
    %v987 = vtanh.pop %v983
    %v988 = vmul.f32 %v984, 0.5
    %v989 = vadd.f32 %v988, 0.5
    %v990 = vmul.f32 %v985, 0.5
    %v991 = vadd.f32 %v990, 0.5
    %v992 = vmul.f32 %v987, 0.5
    %v993 = vadd.f32 %v992, 0.5
    %v994 = vmul.f32 %v991, %v924
    %v995 = vmul.f32 %v989, %v986
    %v996 = vadd.f32 %v994, %v995
    %v997 = vtanh.pop %v996
    %v998 = vmul.f32 %v993, %v997
    %v999 = vpack.c.bf16 %v998, %v998
    %v1000 = vld [vmem:[%s4] sm:$0xf]
    %v1001 = vld [vmem:[%s4 + $0x4] sm:$0xf]
    %v1002 = vld [vmem:[%s4 + $0x8] sm:$0xf]
    %v1003 = vld [vmem:[%s4 + $0xc] sm:$0xf]
    %v1004 = vld [vmem:[%s4 + $0x10] sm:$0xf]
    %v1005 = vld [vmem:[%s4 + $0x14] sm:$0xf]
    %v1006 = vld [vmem:[%s4 + $0x18] sm:$0xf]
    %v1007 = vld [vmem:[%s4 + $0x1c] sm:$0xf]
    %v1008 = vld [vmem:[%s4 + $0x20] sm:$0xf]
    %v1009 = vld [vmem:[%s4 + $0x24] sm:$0xf]
    %v1010 = vld [vmem:[%s4 + $0x28] sm:$0xf]
    %v1011 = vld [vmem:[%s4 + $0x2c] sm:$0xf]
    %v1012 = vld [vmem:[%s4 + $0x30] sm:$0xf]
    %v1013 = vld [vmem:[%s4 + $0x34] sm:$0xf]
    %v1014 = vld [vmem:[%s4 + $0x38] sm:$0xf]
    %v1015 = vld [vmem:[%s4 + $0x3c] sm:$0xf]
    %v1016 = vld [vmem:[%s5] sm:$0x1]
    %v1018 = vperm.slane %v1016, 0
    %v1036 = vunpack.c.l.b16 %v1000
    %v1037 = vunpack.c.l.b16 %v1001
    %v1038 = vunpack.c.l.b16 %v1002
    %v1039 = vunpack.c.l.b16 %v1003
    %v1040 = vunpack.c.l.b16 %v1004
    %v1041 = vunpack.c.l.b16 %v1005
    %v1042 = vunpack.c.l.b16 %v1006
    %v1043 = vunpack.c.l.b16 %v1007
    %v1044 = vunpack.c.l.b16 %v1008
    %v1045 = vunpack.c.l.b16 %v1009
    %v1046 = vunpack.c.l.b16 %v1010
    %v1047 = vunpack.c.l.b16 %v1011
    %v1048 = vunpack.c.l.b16 %v1012
    %v1049 = vunpack.c.l.b16 %v1013
    %v1050 = vunpack.c.l.b16 %v1014
    %v1051 = vunpack.c.l.b16 %v1015
    %v1052 = vpack.c.b16 %v1037, %v1036
    %v1053 = vpack.c.b16 %v1039, %v1038
    %v1054 = vpack.c.b16 %v1041, %v1040
    %v1055 = vpack.c.b16 %v1043, %v1042
    %v1056 = vpack.c.b16 %v1045, %v1044
    %v1057 = vpack.c.b16 %v1047, %v1046
    %v1058 = vpack.c.b16 %v1049, %v1048
    %v1059 = vpack.c.b16 %v1051, %v1050
    %1068 = vmatpush.bf16.msra.mxu0 %v1059
    %1069 = vmatpush.bf16.msra.mxu0 %v1058
    %1070 = vmatpush.bf16.msra.mxu0 %v1057
    %1071 = vmatpush.bf16.msra.mxu0 %v1056
    %1072 = vmatpush.bf16.msra.mxu0 %v1055
    %1073 = vmatpush.bf16.msra.mxu0 %v1054
    %1074 = vmatpush.bf16.msra.mxu0 %v1053
    %1075 = vmatpush.bf16.msra.mxu0 %v1052
    %1076 = vmatmul.bf16.gmra.mxu0 %v999
    %v1077 = vpop.f32.mrf.mxu0
    %v1078 = vadd.f32 %v1018, %v1077
    %v1079 = vpop.f32.mrf.mxu0
    %1080 = vdwg.mxu0
    %vm1081 = vcmask 15360
    %v1082 = vsel %vm1081, %v1078, -inf
    %1083 = vmax.xlane.f32.xlu0 %v1082
    %v1084 = vpop.xlane.xlu0 %1083
    %v1085 = vsub.f32 %v1078, %v1084
    %v1086 = vmul.f32 %v1085, 1.442695
    %v1087 = vpow.pop %v1086
    %v1088 = vsel %vm1081, %v1087, 0.0
    %1089 = vadd.xlane.f32.xlu0 %v1088
    %v1090 = vpop.xlane.xlu0 %1089
    %v1091 = vrcp.pop %v1090
    %v1092 = vmul.f32 %v1090, %v1091
    %v1093 = vsub.f32 1.0, %v1092
    %v1094 = vmul.f32 %v1091, %v1093
    %v1095 = vadd.f32 %v1091, %v1094
    %vm1096 = vweird.f32 %v1090
    %vm1097 = vweird.f32 %v1091
    %vm1098 = vmor %vm1096, %vm1097
    %v1099 = vsel %vm1098, %v1091, %v1095
    %v1100 = vand.u32 2147483647, %v1090
    %vm1101 = vcmp.eq.f32.partialorder %v1100, 8.507059e+37
    %v1102 = vand.u32 %v1090, 2147483648
    %v1103 = vor.u32 1.1754944e-38, %v1102
    %v1104 = vsel %vm1101, %v1103, %v1099
    %v1105 = vmul.f32 %v1087, %v1104
    %vm1106 = vcmask 9216
    %1107 = vst.msk [vmem:[#allocation5] sm:$0x3] %vm1106, %v1105
    // Predicated region
    $region30: #{lstm_forward.1} parent=1 // pred_check
      _
    $region31: #{lstm_forward.1} parent=1 // pred_check_branch
      %1109 = sbr.rel (0) target = $region33
    $region32: #{lstm_forward.1} parent=1 // pred_region
      %1111 = vsyncadd [#allocation4], 0
      %s1113 = sshll.u32 [#allocation5], 4
      %s1114 = int_to_ptr.vmem [resolvable:$true] %s1113
      %s1115 = sshll.u32 %s6, 4
      %s1116 = int_to_ptr.hbm [resolvable:$true] %s1115
      %1118 = dma.vmem_to_hbm [thread:$0]  %s1114, 32, %s1116, [#allocation4]
    $region33: #{lstm_forward.1} parent=1 // pred_fallthru
      _
    // Predicated region
    $region34: #{lstm_forward.1} parent=1 // pred_check
      _
    $region35: #{lstm_forward.1} parent=1 // pred_check_branch
      %1120 = sbr.rel (0) target = $region37
    $region36: #{lstm_forward.1} parent=1 // pred_region
      %1122 = dma.done [#allocation4], 32
    $region37: #{lstm_forward.1} parent=1 // pred_fallthru
      _
    %1123 = vsyncpa [#allocation3], 1
    %1124 = vsyncpa [#allocation4], 1

</llo_original>
